<compile_context>
chip_gen: v7x
topology: tpu7x:2x2x1
jax: 0.10.0
libtpu: 0.0.40
codegen_flags: <defaults>
</compile_context>

<pallas_src>
import functools

import jax
import jax.numpy as jnp
from jax import lax
from jax.experimental import pallas as pl
from jax.experimental.pallas import tpu as pltpu

# Small synthetic problem sizes (the original uses MNIST-derived constants).
N_CHANNELS = 4
CENTRAL_RANGE = 16
D_LATENT = 16
H1 = 100                                    # logical fc1 width
H2 = 200                                    # logical fc2 width
H_OUT = N_CHANNELS * CENTRAL_RANGE          # 64
H3 = 2 * H_OUT                              # 128 = mean || log_sigma (lane-dense)

# Lane/sublane-aligned padded hidden widths used inside the kernel.
H1P = 128
H2P = 256


def _round_up(x, m):
    return (x + m - 1) // m * m


def _cdiv(a, b):
    return -(-a // b)


def decoder_kernel(z_ref, w1_ref, b1_ref, w2_ref, b2_ref, w3_ref, b3_ref, out_ref):
    # fc1 + ReLU  (bf16 operands, f32 accumulation; bias/ReLU in f32)
    h = jnp.dot(z_ref[...], w1_ref[...], preferred_element_type=jnp.float32)
    h = jnp.maximum(h + b1_ref[...], 0.0)
    # fc2 + ReLU
    h = jnp.dot(h.astype(w2_ref.dtype), w2_ref[...], preferred_element_type=jnp.float32)
    h = jnp.maximum(h + b2_ref[...], 0.0)
    # (Dropout(p=0.1) is eval-mode identity here.)
    # fc3
    h = jnp.dot(h.astype(w3_ref.dtype), w3_ref[...], preferred_element_type=jnp.float32)
    h = h + b3_ref[...]
    # Single full-128-lane store: lower 64 lanes = mean, upper 64 = exp(log_sigma).
    # exp over all 128 lanes + select keeps the store lane-dense; the extra EUP work
    # is free filler under the DMA/MXU bound on v6e/v7x (only worth gating on v5e if
    # a bundle dump shows the EUP slot saturated).
    col = lax.broadcasted_iota(jnp.int32, h.shape, 1)
    out_ref[...] = jnp.where(col >= H_OUT, jnp.exp(h), h).astype(out_ref.dtype)


def _decode_packed(z, params, *, tm, out_dtype):
    """Core pallas path. Returns packed (B, 2, N_CHANNELS, CENTRAL_RANGE):
    channel 0 = mean, channel 1 = scale."""
    w1, b1, w2, b2, w3, b3 = params
    B = z.shape[0]

    # --- Tile / grid selection: minimal padding, >=2 steps for large B (v7x) ---
    tm_max = max(8, _round_up(tm, 8))
    min_steps = 2 if B >= 1024 else 1          # feed both v7x TensorCores when it pays
    n_steps = max(_cdiv(B, tm_max), min_steps)
    TM = _round_up(_cdiv(B, n_steps), 8)       # per-step rows; padding <= 7 per step
    Bp = TM * n_steps

    zp = z.astype(jnp.bfloat16)
    if Bp != B:
        zp = jnp.pad(zp, ((0, Bp - B), (0, 0)))

    out_itemsize = jnp.dtype(out_dtype).itemsize

    # --- VMEM budget (double-buffered ins/outs + f32 intermediates), with margin ---
    weight_bytes = 2 * ((D_LATENT * H1P + H1P * H2P + H2P * H3) * 2
                        + (H1P + H2P + H3) * 4)
    io_bytes = 2 * TM * D_LATENT * 2 + 2 * TM * H3 * out_itemsize
    interm_bytes = TM * (H1P + H2P + H3) * (4 + 2)   # f32 activations + bf16 copies
    vmem_limit = int(min(max(2 * (weight_bytes + io_bytes + interm_bytes), 16 << 20),
                         48 << 20))

    # --- Cost hint for the XLA scheduler ---
    flops = 2 * Bp * (D_LATENT * H1P + H1P * H2P + H2P * H3)
    transcendentals = Bp * H3
    bytes_accessed = (Bp * D_LATENT * 2 + Bp * H3 * out_itemsize
                      + (D_LATENT * H1P + H1P * H2P + H2P * H3) * 2
                      + (H1P + H2P + H3) * 4)
    cost = pl.CostEstimate(flops=flops, transcendentals=transcendentals,
                           bytes_accessed=bytes_accessed)

    def weight_spec(shape):
        # Full-array block, constant index_map -> stays VMEM-resident across steps.
        return pl.BlockSpec(shape, lambda i: (0, 0))

    out = pl.pallas_call(
        decoder_kernel,
        out_shape=jax.ShapeDtypeStruct((Bp, H3), out_dtype),
        grid=(n_steps,),
        in_specs=[
            pl.BlockSpec((TM, D_LATENT), lambda i: (i, 0)),   # z tile
            weight_spec((D_LATENT, H1P)),                     # W1
            weight_spec((1, H1P)),                            # b1
            weight_spec((H1P, H2P)),                          # W2
            weight_spec((1, H2P)),                            # b2
            weight_spec((H2P, H3)),                           # W3
            weight_spec((1, H3)),                             # b3
        ],
        out_specs=pl.BlockSpec((TM, H3), lambda i: (i, 0)),
        compiler_params=pltpu.CompilerParams(
            dimension_semantics=("parallel",),
            vmem_limit_bytes=vmem_limit,
        ),
        cost_estimate=cost,
    )(zp, w1, b1, w2, b2, w3, b3)

    # Trim (<=7*n_steps pad rows) and reshape (free, contiguous): (B, 2, C, R).
    return out[:B].reshape(B, 2, N_CHANNELS, CENTRAL_RANGE)


@functools.partial(jax.jit, static_argnames=("tm", "out_dtype"))
def forward_decoder_packed(z, params, *, tm=2048, out_dtype=jnp.float32):
    """Preferred perf API: packed (B, 2, N_CHANNELS, CENTRAL_RANGE);
    [:, 0] = mean, [:, 1] = scale. Index at the consumer to avoid an extra HBM pass."""
    return _decode_packed(z, params, tm=tm, out_dtype=out_dtype)


@functools.partial(jax.jit, static_argnames=("tm", "out_dtype"))
def forward_decoder(z, params, *, tm=2048, out_dtype=jnp.float32):
    """Faithful API: (mean, scale), each (B, 1, N_CHANNELS, CENTRAL_RANGE),
    i.e. the parameters of the torch module's dist.Normal."""
    packed = _decode_packed(z, params, tm=tm, out_dtype=out_dtype)
    B = z.shape[0]
    mean = packed[:, 0].reshape(B, 1, N_CHANNELS, CENTRAL_RANGE)
    scale = packed[:, 1].reshape(B, 1, N_CHANNELS, CENTRAL_RANGE)
    return mean, scale


def init_params(key):
    """Deterministic init mimicking nn.Linear default: U(-1/sqrt(fan_in), 1/sqrt(fan_in))."""
    def linear(key, fan_in, fan_out):
        kw, kb = jax.random.split(key)
        bound = 1.0 / jnp.sqrt(fan_in)
        w = jax.random.uniform(kw, (fan_in, fan_out), jnp.float32, -bound, bound)
        b = jax.random.uniform(kb, (1, fan_out), jnp.float32, -bound, bound)
        return w, b

    k1, k2, k3 = jax.random.split(key, 3)
    w1, b1 = linear(k1, D_LATENT, H1)
    w2, b2 = linear(k2, H1, H2)
    w3, b3 = linear(k3, H2, H3)
    return (w1, b1, w2, b2, w3, b3)


def prepare_params(params):
    """Zero-pad hidden dims to (8,128)-aligned widths and cast weights to bf16.

    Padded bias entries are 0 and padded weight rows/cols are 0, so ReLU keeps
    the padded hidden columns at exactly 0 and they contribute nothing downstream.
    Biases stay f32 (added to the f32 accumulator)."""
    w1, b1, w2, b2, w3, b3 = params

    def pad2(a, rows, cols):
        return jnp.pad(a, ((0, rows - a.shape[0]), (0, cols - a.shape[1])))

    w1p = pad2(w1, D_LATENT, H1P).astype(jnp.bfloat16)
    b1p = pad2(b1, 1, H1P)
    w2p = pad2(w2, H1P, H2P).astype(jnp.bfloat16)
    b2p = pad2(b2, 1, H2P)
    w3p = pad2(w3, H2P, H3).astype(jnp.bfloat16)
    b3p = b3
    return (w1p, b1p, w2p, b2p, w3p, b3p)


def reference(z, prepared_params):
    """Pure-JAX reference mirroring the kernel math (bf16 matmul operands, f32 accum)."""
    w1, b1, w2, b2, w3, b3 = prepared_params
    h = jnp.dot(z.astype(jnp.bfloat16), w1, preferred_element_type=jnp.float32)
    h = jnp.maximum(h + b1, 0.0)
    h = jnp.dot(h.astype(jnp.bfloat16), w2, preferred_element_type=jnp.float32)
    h = jnp.maximum(h + b2, 0.0)
    h = jnp.dot(h.astype(jnp.bfloat16), w3, preferred_element_type=jnp.float32) + b3
    B = z.shape[0]
    mean = h[:, :H_OUT].reshape(B, 1, N_CHANNELS, CENTRAL_RANGE)
    scale = jnp.exp(h[:, H_OUT:]).reshape(B, 1, N_CHANNELS, CENTRAL_RANGE)
    return mean, scale


if __name__ == "__main__":
    key = jax.random.PRNGKey(0)
    kp, kz = jax.random.split(key)
    params = prepare_params(init_params(kp))

    # Small batches; B=20 also exercises the ragged (padded-to-24) tile path.
    for B in (8, 20):
        z = jax.random.normal(jax.random.fold_in(kz, B), (B, D_LATENT), jnp.float32)

        packed = forward_decoder_packed(z, params)
        mean, scale = forward_decoder(z, params)
        jax.block_until_ready((packed, mean, scale))

        mean_ref, scale_ref = reference(z, params)
        assert packed.shape == (B, 2, N_CHANNELS, CENTRAL_RANGE)
        assert mean.shape == (B, 1, N_CHANNELS, CENTRAL_RANGE)
        assert scale.shape == (B, 1, N_CHANNELS, CENTRAL_RANGE)
        assert jnp.allclose(mean, mean_ref, atol=2e-3, rtol=2e-3)
        assert jnp.allclose(scale, scale_ref, atol=2e-3, rtol=2e-3)
        assert jnp.allclose(packed[:, 0:1], mean_ref, atol=2e-3, rtol=2e-3)
        assert jnp.allclose(packed[:, 1:2], scale_ref, atol=2e-3, rtol=2e-3)
        assert bool(jnp.all(scale > 0))

    print("KERNEL_OK")
</pallas_src>

<mosaic_0001>
module attributes {stable_mosaic.version = 11 : i64} {
  func.func @decoder_kernel(%arg0: i32, %arg1: memref<8x16xbf16, #tpu.memory_space<vmem>>, %arg2: memref<16x128xbf16, #tpu.memory_space<vmem>>, %arg3: memref<1x128xf32, #tpu.memory_space<vmem>>, %arg4: memref<128x256xbf16, #tpu.memory_space<vmem>>, %arg5: memref<1x256xf32, #tpu.memory_space<vmem>>, %arg6: memref<256x128xbf16, #tpu.memory_space<vmem>>, %arg7: memref<1x128xf32, #tpu.memory_space<vmem>>, %arg8: memref<8x128xf32, #tpu.memory_space<vmem>>) attributes {dimension_semantics = [#tpu.dimension_semantics<parallel>], iteration_bounds = array<i64: 1>, scalar_prefetch = 0 : i64, scratch_operands = 0 : i64, tpu.core_type = #tpu.core_type<tc>, window_params = [{transform_indices = @transform_0, window_bounds = array<i64: 8, 16>}, {pipeline_mode = #tpu.pipeline_mode<synchronous>, transform_indices = @transform_1, window_bounds = array<i64: 16, 128>}, {pipeline_mode = #tpu.pipeline_mode<synchronous>, transform_indices = @transform_2, window_bounds = array<i64: 1, 128>}, {pipeline_mode = #tpu.pipeline_mode<synchronous>, transform_indices = @transform_3, window_bounds = array<i64: 128, 256>}, {pipeline_mode = #tpu.pipeline_mode<synchronous>, transform_indices = @transform_4, window_bounds = array<i64: 1, 256>}, {pipeline_mode = #tpu.pipeline_mode<synchronous>, transform_indices = @transform_5, window_bounds = array<i64: 256, 128>}, {pipeline_mode = #tpu.pipeline_mode<synchronous>, transform_indices = @transform_6, window_bounds = array<i64: 1, 128>}, {transform_indices = @transform_7, window_bounds = array<i64: 8, 128>}]} {
    %c0 = arith.constant 0 : index
    %c0_0 = arith.constant 0 : index
    %0 = vector.load %arg1[%c0, %c0_0] : memref<8x16xbf16, #tpu.memory_space<vmem>>, vector<8x16xbf16>
    %c0_1 = arith.constant 0 : index
    %c0_2 = arith.constant 0 : index
    %1 = vector.load %arg2[%c0_1, %c0_2] : memref<16x128xbf16, #tpu.memory_space<vmem>>, vector<16x128xbf16>
    %cst = arith.constant dense<0.000000e+00> : vector<8x128xf32>
    %2 = tpu.matmul %0, %1, %cst {dimension_numbers = #tpu.dot_dimension_numbers<[1], [0], [0], [1], [0, 0, 1, 1], [], []>} : vector<8x16xbf16>, vector<16x128xbf16>, vector<8x128xf32> -> vector<8x128xf32>
    %c0_3 = arith.constant 0 : index
    %c0_4 = arith.constant 0 : index
    %3 = vector.load %arg3[%c0_3, %c0_4] : memref<1x128xf32, #tpu.memory_space<vmem>>, vector<1x128xf32>
    %4 = vector.broadcast %3 : vector<1x128xf32> to vector<8x128xf32>
    %5 = arith.addf %2, %4 : vector<8x128xf32>
    %cst_5 = arith.constant 0.000000e+00 : f32
    %6 = vector.broadcast %cst_5 : f32 to vector<8x128xf32>
    %7 = arith.maximumf %5, %6 : vector<8x128xf32>
    %8 = arith.truncf %7 : vector<8x128xf32> to vector<8x128xbf16>
    %c0_6 = arith.constant 0 : index
    %c0_7 = arith.constant 0 : index
    %9 = vector.load %arg4[%c0_6, %c0_7] : memref<128x256xbf16, #tpu.memory_space<vmem>>, vector<128x256xbf16>
    %cst_8 = arith.constant dense<0.000000e+00> : vector<8x256xf32>
    %10 = tpu.matmul %8, %9, %cst_8 {dimension_numbers = #tpu.dot_dimension_numbers<[1], [0], [0], [1], [0, 0, 1, 1], [], []>} : vector<8x128xbf16>, vector<128x256xbf16>, vector<8x256xf32> -> vector<8x256xf32>
    %c0_9 = arith.constant 0 : index
    %c0_10 = arith.constant 0 : index
    %11 = vector.load %arg5[%c0_9, %c0_10] : memref<1x256xf32, #tpu.memory_space<vmem>>, vector<1x256xf32>
    %12 = vector.broadcast %11 : vector<1x256xf32> to vector<8x256xf32>
    %13 = arith.addf %10, %12 : vector<8x256xf32>
    %cst_11 = arith.constant 0.000000e+00 : f32
    %14 = vector.broadcast %cst_11 : f32 to vector<8x256xf32>
    %15 = arith.maximumf %13, %14 : vector<8x256xf32>
    %16 = arith.truncf %15 : vector<8x256xf32> to vector<8x256xbf16>
    %c0_12 = arith.constant 0 : index
    %c0_13 = arith.constant 0 : index
    %17 = vector.load %arg6[%c0_12, %c0_13] : memref<256x128xbf16, #tpu.memory_space<vmem>>, vector<256x128xbf16>
    %cst_14 = arith.constant dense<0.000000e+00> : vector<8x128xf32>
    %18 = tpu.matmul %16, %17, %cst_14 {dimension_numbers = #tpu.dot_dimension_numbers<[1], [0], [0], [1], [0, 0, 1, 1], [], []>} : vector<8x256xbf16>, vector<256x128xbf16>, vector<8x128xf32> -> vector<8x128xf32>
    %c0_15 = arith.constant 0 : index
    %c0_16 = arith.constant 0 : index
    %19 = vector.load %arg7[%c0_15, %c0_16] : memref<1x128xf32, #tpu.memory_space<vmem>>, vector<1x128xf32>
    %20 = vector.broadcast %19 : vector<1x128xf32> to vector<8x128xf32>
    %21 = arith.addf %18, %20 : vector<8x128xf32>
    %22 = tpu.iota {dimensions = array<i32: 1>} : vector<8x128xi32>
    %c64_i32 = arith.constant 64 : i32
    %23 = vector.broadcast %c64_i32 : i32 to vector<8x128xi32>
    %24 = arith.cmpi sge, %22, %23 : vector<8x128xi32>
    %25 = math.exp %21 : vector<8x128xf32>
    %26 = arith.select %24, %25, %21 : vector<8x128xi1>, vector<8x128xf32>
    %c0_17 = arith.constant 0 : index
    %c0_18 = arith.constant 0 : index
    %27 = vector.load %arg8[%c0_17, %c0_18] : memref<8x128xf32, #tpu.memory_space<vmem>>, vector<8x128xf32>
    tpu.vector_store %arg8[%c0_17, %c0_18], %26 {strides = array<i32>} : memref<8x128xf32, #tpu.memory_space<vmem>>, vector<8x128xf32>,
    return
  }
  func.func @transform_0(%arg0: i32) -> (i32, i32) {
    %c0_i32 = arith.constant 0 : i32
    %c0_i32_0 = arith.constant 0 : i32
    return %arg0, %c0_i32 : i32, i32
  }
  func.func @transform_1(%arg0: i32) -> (i32, i32) {
    %c0_i32 = arith.constant 0 : i32
    %c0_i32_0 = arith.constant 0 : i32
    %c0_i32_1 = arith.constant 0 : i32
    return %c0_i32, %c0_i32_0 : i32, i32
  }
  func.func @transform_2(%arg0: i32) -> (i32, i32) {
    %c0_i32 = arith.constant 0 : i32
    %c0_i32_0 = arith.constant 0 : i32
    %c0_i32_1 = arith.constant 0 : i32
    return %c0_i32, %c0_i32_0 : i32, i32
  }
  func.func @transform_3(%arg0: i32) -> (i32, i32) {
    %c0_i32 = arith.constant 0 : i32
    %c0_i32_0 = arith.constant 0 : i32
    %c0_i32_1 = arith.constant 0 : i32
    return %c0_i32, %c0_i32_0 : i32, i32
  }
  func.func @transform_4(%arg0: i32) -> (i32, i32) {
    %c0_i32 = arith.constant 0 : i32
    %c0_i32_0 = arith.constant 0 : i32
    %c0_i32_1 = arith.constant 0 : i32
    return %c0_i32, %c0_i32_0 : i32, i32
  }
  func.func @transform_5(%arg0: i32) -> (i32, i32) {
    %c0_i32 = arith.constant 0 : i32
    %c0_i32_0 = arith.constant 0 : i32
    %c0_i32_1 = arith.constant 0 : i32
    return %c0_i32, %c0_i32_0 : i32, i32
  }
  func.func @transform_6(%arg0: i32) -> (i32, i32) {
    %c0_i32 = arith.constant 0 : i32
    %c0_i32_0 = arith.constant 0 : i32
    %c0_i32_1 = arith.constant 0 : i32
    return %c0_i32, %c0_i32_0 : i32, i32
  }
  func.func @transform_7(%arg0: i32) -> (i32, i32) {
    %c0_i32 = arith.constant 0 : i32
    %c0_i32_0 = arith.constant 0 : i32
    return %arg0, %c0_i32 : i32, i32
  }
}

</mosaic_0001>

<llo_original>
// kernel: forward_decoder_packed.1
$region0: #{forward_decoder_packed.1}
  #allocation0 [shape = 'u32[]', space=smem, size = 0x4, offset = 0x4, fixed_abs, tag = 'smem constant byte address 0x4 - core index']
  #allocation1 [shape = 'u32[144,128]{1,0:T(1,128)}', space=vmem, size = 0x12000, scoped, tag = 'internal scratch']
  %s0 = inlined_call_operand.vmem [shape: bf16[8,16], index: 0, kind: input, shape index: {}]
  %s1 = inlined_call_operand.vmem [shape: bf16[16,128], index: 1, kind: input, shape index: {}]
  %s2 = inlined_call_operand.vmem [shape: f32[1,128], index: 2, kind: input, shape index: {}]
  %s3 = inlined_call_operand.hbm [shape: bf16[128,256], index: 3, kind: input, shape index: {}]
  %s4 = inlined_call_operand.vmem [shape: f32[1,256], index: 4, kind: input, shape index: {}]
  %s5 = inlined_call_operand.hbm [shape: bf16[256,128], index: 5, kind: input, shape index: {}]
  %s6 = inlined_call_operand.vmem [shape: f32[1,128], index: 6, kind: input, shape index: {}]
  %s7 = inlined_call_operand.vmem [shape: f32[8,128], index: 7, kind: output, shape index: {}]
  %s8 = sld [smem:[#allocation0]]
  $region46: #{forward_decoder_packed.1} parent=0
    _
  %s10 = ssub.s32 1, %s8
  %s11 = scalar_select 0, %s10, %s8
  $region1: #{forward_decoder_packed.1} parent=0
    #allocation2 [shape = 'u8[65536]{0}', space=vmem, size = 0x10000, scoped, tag = 'input window, operand 3, single buffered']
    #allocation3 [shape = 's32[1]{0}', space=sflag, size = 0x4, scoped, tag = 'scoped memory for forward_decoder_packed.1']
    #allocation4 [shape = 'u8[65536]{0}', space=vmem, size = 0x10000, scoped, tag = 'input window, operand 5, single buffered']
    #allocation5 [shape = 's32[1]{0}', space=sflag, size = 0x4, scoped, tag = 'scoped memory for forward_decoder_packed.1']
    %12 = vsyncpa [#allocation3], 0
    %13 = vsyncpa [#allocation5], 0
    // Predicated region
    $region2: #{forward_decoder_packed.1} parent=1 // pred_check
      _
    $region3: #{forward_decoder_packed.1} parent=1 // pred_check_branch
      %15 = sbr.rel (0) target = $region5
    $region4: #{forward_decoder_packed.1} parent=1 // pred_region
      _
    $region5: #{forward_decoder_packed.1} parent=1 // pred_fallthru
      _
    // Predicated region
    $region6: #{forward_decoder_packed.1} parent=1 // pred_check
      _
    $region7: #{forward_decoder_packed.1} parent=1 // pred_check_branch
      %17 = sbr.rel (0) target = $region9
    $region8: #{forward_decoder_packed.1} parent=1 // pred_region
      _
    $region9: #{forward_decoder_packed.1} parent=1 // pred_fallthru
      _
    // Predicated region
    $region10: #{forward_decoder_packed.1} parent=1 // pred_check
      _
    $region11: #{forward_decoder_packed.1} parent=1 // pred_check_branch
      %19 = sbr.rel (0) target = $region13
    $region12: #{forward_decoder_packed.1} parent=1 // pred_region
      _
    $region13: #{forward_decoder_packed.1} parent=1 // pred_fallthru
      _
    // Predicated region
    $region14: #{forward_decoder_packed.1} parent=1 // pred_check
      _
    $region15: #{forward_decoder_packed.1} parent=1 // pred_check_branch
      %21 = sbr.rel (0) target = $region17
    $region16: #{forward_decoder_packed.1} parent=1 // pred_region
      %s23 = ssub.s32 2048, 2048
      %24 = vsyncadd [#allocation3], %s23
      %s25 = sshll.u32 [#allocation2], 4
      %s26 = int_to_ptr.vmem [resolvable:$true] %s25
      %31 = dma.hbm_to_vmem [thread:$0]  %s3, 2048, %s26, [#allocation3], 128, 128, 8
    $region17: #{forward_decoder_packed.1} parent=1 // pred_fallthru
      _
    // Predicated region
    $region18: #{forward_decoder_packed.1} parent=1 // pred_check
      _
    $region19: #{forward_decoder_packed.1} parent=1 // pred_check_branch
      %33 = sbr.rel (0) target = $region21
    $region20: #{forward_decoder_packed.1} parent=1 // pred_region
      _
    $region21: #{forward_decoder_packed.1} parent=1 // pred_fallthru
      _
    // Predicated region
    $region22: #{forward_decoder_packed.1} parent=1 // pred_check
      _
    $region23: #{forward_decoder_packed.1} parent=1 // pred_check_branch
      %35 = sbr.rel (0) target = $region25
    $region24: #{forward_decoder_packed.1} parent=1 // pred_region
      %s37 = ssub.s32 2048, 2048
      %38 = vsyncadd [#allocation5], %s37
      %s39 = sshll.u32 [#allocation4], 4
      %s40 = int_to_ptr.vmem [resolvable:$true] %s39
      %45 = dma.hbm_to_vmem [thread:$0]  %s5, 2048, %s40, [#allocation5], 64, 64, 4
    $region25: #{forward_decoder_packed.1} parent=1 // pred_fallthru
      _
    // Predicated region
    $region26: #{forward_decoder_packed.1} parent=1 // pred_check
      _
    $region27: #{forward_decoder_packed.1} parent=1 // pred_check_branch
      %47 = sbr.rel (0) target = $region29
    $region28: #{forward_decoder_packed.1} parent=1 // pred_region
      _
    $region29: #{forward_decoder_packed.1} parent=1 // pred_fallthru
      _
    // Predicated region
    $region30: #{forward_decoder_packed.1} parent=1 // pred_check
      _
    $region31: #{forward_decoder_packed.1} parent=1 // pred_check_branch
      %49 = sbr.rel (0) target = $region33
    $region32: #{forward_decoder_packed.1} parent=1 // pred_region
      %50 = dma.done [#allocation3], 2048
    $region33: #{forward_decoder_packed.1} parent=1 // pred_fallthru
      _
    // Predicated region
    $region34: #{forward_decoder_packed.1} parent=1 // pred_check
      _
    $region35: #{forward_decoder_packed.1} parent=1 // pred_check_branch
      %52 = sbr.rel (0) target = $region37
    $region36: #{forward_decoder_packed.1} parent=1 // pred_region
      %53 = dma.done [#allocation5], 2048
    $region37: #{forward_decoder_packed.1} parent=1 // pred_fallthru
      _
    %v55 = vld [vmem:[%s0] sm:$0xf]
    %v56 = vld [vmem:[%s1] sm:$0xf]
    %v57 = vld [vmem:[%s1 + $0x4] sm:$0xf]
    %v58 = vld [vmem:[%s2] sm:$0x1]
    %v60 = vlaneseq
    %v61 = vshrl.u32 %v60, 7
    %v62 = vsub.s32 0, %v61
    %v63 = vrot.slane %v58, %v62
    %v67 = vunpack.c.l.b16 %v56
    %v68 = vunpack.c.l.b16 %v57
    %v69 = vpack.c.b16 %v68, %v67
    %vm71 = vcmask 130048
    %v73 = vsel %vm71, %v55, 0
    %75 = vmatprep.subr.bf16.mxu0 0
    %76 = vmatpush1.bf16.msra.mxu0 %v69
    %77 = vmatprep.subr.bf16.mxu0 0
    %78 = vmatpush1.bf16.msra.mxu0 0
    %79 = vmatprep.subr.bf16.mxu0 0
    %80 = vmatpush1.bf16.msra.mxu0 0
    %81 = vmatprep.subr.bf16.mxu0 0
    %82 = vmatpush1.bf16.msra.mxu0 0
    %83 = vmatprep.subr.bf16.mxu0 0
    %84 = vmatpush1.bf16.msra.mxu0 0
    %85 = vmatprep.subr.bf16.mxu0 0
    %86 = vmatpush1.bf16.msra.mxu0 0
    %87 = vmatprep.subr.bf16.mxu0 0
    %88 = vmatpush1.bf16.msra.mxu0 0
    %89 = vmatprep.subr.bf16.mxu0 0
    %90 = vmatpush1.bf16.msra.mxu0 0
    %91 = vmatprep.subr.bf16.mxu0 0
    %92 = vmatpush1.bf16.msra.mxu0 0
    %93 = vmatprep.subr.bf16.mxu0 0
    %94 = vmatpush1.bf16.msra.mxu0 0
    %95 = vmatprep.subr.bf16.mxu0 0
    %96 = vmatpush1.bf16.msra.mxu0 0
    %97 = vmatprep.subr.bf16.mxu0 0
    %98 = vmatpush1.bf16.msra.mxu0 0
    %99 = vmatprep.subr.bf16.mxu0 0
    %100 = vmatpush1.bf16.msra.mxu0 0
    %101 = vmatprep.subr.bf16.mxu0 0
    %102 = vmatpush1.bf16.msra.mxu0 0
    %103 = vmatprep.subr.bf16.mxu0 0
    %104 = vmatpush1.bf16.msra.mxu0 0
    %105 = vmatprep.subr.bf16.mxu0 0
    %106 = vmatpush1.bf16.msra.mxu0 0
    %107 = vmatprep.mubr.bf16.mxu0 0
    %108 = vmatmul.mubr.bf16.gmra.mrb[0].mxu0 %v73
    %v109 = vpop.f32.mrb[0].mxu0
    %v110 = vadd.f32 %v63, %v109
    %v111 = vpop.f32.mrb[0].mxu0
    %v112 = vpop.f32.mrb[0].mxu0
    %v113 = vpop.f32.mrb[0].mxu0
    %114 = vdwg.mxu0
    %v115 = vmax.f32 %v110, 0.0
    %v116 = vpack.c.bf16 %v115, %v115
    %v117 = vld [vmem:[#allocation2] sm:$0xff]
    %v118 = vld [vmem:[#allocation2 + $0x8] sm:$0xff]
    %v119 = vld [vmem:[#allocation2 + $0x10] sm:$0xff]
    %v120 = vld [vmem:[#allocation2 + $0x18] sm:$0xff]
    %v121 = vld [vmem:[#allocation2 + $0x20] sm:$0xff]
    %v122 = vld [vmem:[#allocation2 + $0x28] sm:$0xff]
    %v123 = vld [vmem:[#allocation2 + $0x30] sm:$0xff]
    %v124 = vld [vmem:[#allocation2 + $0x38] sm:$0xff]
    %v125 = vld [vmem:[#allocation2 + $0x40] sm:$0xff]
    %v126 = vld [vmem:[#allocation2 + $0x48] sm:$0xff]
    %v127 = vld [vmem:[#allocation2 + $0x50] sm:$0xff]
    %v128 = vld [vmem:[#allocation2 + $0x58] sm:$0xff]
    %v129 = vld [vmem:[#allocation2 + $0x60] sm:$0xff]
    %v130 = vld [vmem:[#allocation2 + $0x68] sm:$0xff]
    %v131 = vld [vmem:[#allocation2 + $0x70] sm:$0xff]
    %v132 = vld [vmem:[#allocation2 + $0x78] sm:$0xff]
    %v133 = vld [vmem:[%s4] sm:$0x3]
    %v135 = vlaneseq
    %v136 = vshrl.u32 %v135, 7
    %v137 = vsub.s32 0, %v136
    %v138 = vrot.slane %v133, %v137
    %v139 = vlaneseq
    %v140 = vshrl.u32 %v139, 7
    %v141 = vsub.s32 1, %v140
    %v142 = vrot.slane %v133, %v141
    %v161 = vunpack.c.l.b16 %v117
    %v162 = vunpack.c.h.b16 %v117
    %v163 = vunpack.c.l.b16 %v118
    %v164 = vunpack.c.h.b16 %v118
    %v165 = vunpack.c.l.b16 %v119
    %v166 = vunpack.c.h.b16 %v119
    %v167 = vunpack.c.l.b16 %v120
    %v168 = vunpack.c.h.b16 %v120
    %v169 = vunpack.c.l.b16 %v121
    %v170 = vunpack.c.h.b16 %v121
    %v171 = vunpack.c.l.b16 %v122
    %v172 = vunpack.c.h.b16 %v122
    %v173 = vunpack.c.l.b16 %v123
    %v174 = vunpack.c.h.b16 %v123
    %v175 = vunpack.c.l.b16 %v124
    %v176 = vunpack.c.h.b16 %v124
    %v177 = vunpack.c.l.b16 %v125
    %v178 = vunpack.c.h.b16 %v125
    %v179 = vunpack.c.l.b16 %v126
    %v180 = vunpack.c.h.b16 %v126
    %v181 = vunpack.c.l.b16 %v127
    %v182 = vunpack.c.h.b16 %v127
    %v183 = vunpack.c.l.b16 %v128
    %v184 = vunpack.c.h.b16 %v128
    %v185 = vunpack.c.l.b16 %v129
    %v186 = vunpack.c.h.b16 %v129
    %v187 = vunpack.c.l.b16 %v130
    %v188 = vunpack.c.h.b16 %v130
    %v189 = vunpack.c.l.b16 %v131
    %v190 = vunpack.c.h.b16 %v131
    %v191 = vunpack.c.l.b16 %v132
    %v192 = vunpack.c.h.b16 %v132
    %v193 = vpack.c.b16 %v163, %v161
    %v194 = vpack.c.b16 %v164, %v162
    %v195 = vpack.c.b16 %v167, %v165
    %v196 = vpack.c.b16 %v168, %v166
    %v197 = vpack.c.b16 %v171, %v169
    %v198 = vpack.c.b16 %v172, %v170
    %v199 = vpack.c.b16 %v175, %v173
    %v200 = vpack.c.b16 %v176, %v174
    %v201 = vpack.c.b16 %v179, %v177
    %v202 = vpack.c.b16 %v180, %v178
    %v203 = vpack.c.b16 %v183, %v181
    %v204 = vpack.c.b16 %v184, %v182
    %v205 = vpack.c.b16 %v187, %v185
    %v206 = vpack.c.b16 %v188, %v186
    %v207 = vpack.c.b16 %v191, %v189
    %v208 = vpack.c.b16 %v192, %v190
    %225 = vmatprep.subr.bf16.mxu0 %v194
    %226 = vmatpush1.bf16.msra.mxu0 %v193
    %227 = vmatprep.subr.bf16.mxu0 %v196
    %228 = vmatpush1.bf16.msra.mxu0 %v195
    %229 = vmatprep.subr.bf16.mxu0 %v198
    %230 = vmatpush1.bf16.msra.mxu0 %v197
    %231 = vmatprep.subr.bf16.mxu0 %v200
    %232 = vmatpush1.bf16.msra.mxu0 %v199
    %233 = vmatprep.subr.bf16.mxu0 %v202
    %234 = vmatpush1.bf16.msra.mxu0 %v201
    %235 = vmatprep.subr.bf16.mxu0 %v204
    %236 = vmatpush1.bf16.msra.mxu0 %v203
    %237 = vmatprep.subr.bf16.mxu0 %v206
    %238 = vmatpush1.bf16.msra.mxu0 %v205
    %239 = vmatprep.subr.bf16.mxu0 %v208
    %240 = vmatpush1.bf16.msra.mxu0 %v207
    %241 = vmatprep.subr.bf16.mxu0 0
    %242 = vmatpush1.bf16.msra.mxu0 0
    %243 = vmatprep.subr.bf16.mxu0 0
    %244 = vmatpush1.bf16.msra.mxu0 0
    %245 = vmatprep.subr.bf16.mxu0 0
    %246 = vmatpush1.bf16.msra.mxu0 0
    %247 = vmatprep.subr.bf16.mxu0 0
    %248 = vmatpush1.bf16.msra.mxu0 0
    %249 = vmatprep.subr.bf16.mxu0 0
    %250 = vmatpush1.bf16.msra.mxu0 0
    %251 = vmatprep.subr.bf16.mxu0 0
    %252 = vmatpush1.bf16.msra.mxu0 0
    %253 = vmatprep.subr.bf16.mxu0 0
    %254 = vmatpush1.bf16.msra.mxu0 0
    %255 = vmatprep.subr.bf16.mxu0 0
    %256 = vmatpush1.bf16.msra.mxu0 0
    %257 = vmatprep.mubr.bf16.mxu0 0
    %258 = vmatmul.mubr.bf16.gmra.mrb[0].mxu0 %v116
    %v259 = vpop.f32.mrb[0].mxu0
    %v260 = vadd.f32 %v138, %v259
    %v261 = vpop.f32.mrb[0].mxu0
    %v262 = vadd.f32 %v142, %v261
    %v263 = vpop.f32.mrb[0].mxu0
    %v264 = vpop.f32.mrb[0].mxu0
    %265 = vdwg.mxu0
    %v266 = vmax.f32 %v260, 0.0
    %v267 = vmax.f32 %v262, 0.0
    %v268 = vpack.c.bf16 %v266, %v266
    %v269 = vpack.c.bf16 %v267, %v267
    %v270 = vld [vmem:[#allocation4] sm:$0xf]
    %v271 = vld [vmem:[#allocation4 + $0x4] sm:$0xf]
    %v272 = vld [vmem:[#allocation4 + $0x8] sm:$0xf]
    %v273 = vld [vmem:[#allocation4 + $0xc] sm:$0xf]
    %v274 = vld [vmem:[#allocation4 + $0x10] sm:$0xf]
    %v275 = vld [vmem:[#allocation4 + $0x14] sm:$0xf]
    %v276 = vld [vmem:[#allocation4 + $0x18] sm:$0xf]
    %v277 = vld [vmem:[#allocation4 + $0x1c] sm:$0xf]
    %v278 = vld [vmem:[#allocation4 + $0x20] sm:$0xf]
    %v279 = vld [vmem:[#allocation4 + $0x24] sm:$0xf]
    %v280 = vld [vmem:[#allocation4 + $0x28] sm:$0xf]
    %v281 = vld [vmem:[#allocation4 + $0x2c] sm:$0xf]
    %v282 = vld [vmem:[#allocation4 + $0x30] sm:$0xf]
    %v283 = vld [vmem:[#allocation4 + $0x34] sm:$0xf]
    %v284 = vld [vmem:[#allocation4 + $0x38] sm:$0xf]
    %v285 = vld [vmem:[#allocation4 + $0x3c] sm:$0xf]
    %v286 = vld [vmem:[#allocation4 + $0x40] sm:$0xf]
    %v287 = vld [vmem:[#allocation4 + $0x44] sm:$0xf]
    %v288 = vld [vmem:[#allocation4 + $0x48] sm:$0xf]
    %v289 = vld [vmem:[#allocation4 + $0x4c] sm:$0xf]
    %v290 = vld [vmem:[#allocation4 + $0x50] sm:$0xf]
    %v291 = vld [vmem:[#allocation4 + $0x54] sm:$0xf]
    %v292 = vld [vmem:[#allocation4 + $0x58] sm:$0xf]
    %v293 = vld [vmem:[#allocation4 + $0x5c] sm:$0xf]
    %v294 = vld [vmem:[#allocation4 + $0x60] sm:$0xf]
    %v295 = vld [vmem:[#allocation4 + $0x64] sm:$0xf]
    %v296 = vld [vmem:[#allocation4 + $0x68] sm:$0xf]
    %v297 = vld [vmem:[#allocation4 + $0x6c] sm:$0xf]
    %v298 = vld [vmem:[#allocation4 + $0x70] sm:$0xf]
    %v299 = vld [vmem:[#allocation4 + $0x74] sm:$0xf]
    %v300 = vld [vmem:[#allocation4 + $0x78] sm:$0xf]
    %v301 = vld [vmem:[#allocation4 + $0x7c] sm:$0xf]
    %v302 = vld [vmem:[%s6] sm:$0x1]
    %v304 = vlaneseq
    %v305 = vshrl.u32 %v304, 7
    %v306 = vsub.s32 0, %v305
    %v307 = vrot.slane %v302, %v306
    %v341 = vunpack.c.l.b16 %v270
    %v342 = vunpack.c.l.b16 %v271
    %v343 = vunpack.c.l.b16 %v272
    %v344 = vunpack.c.l.b16 %v273
    %v345 = vunpack.c.l.b16 %v274
    %v346 = vunpack.c.l.b16 %v275
    %v347 = vunpack.c.l.b16 %v276
    %v348 = vunpack.c.l.b16 %v277
    %v349 = vunpack.c.l.b16 %v278
    %v350 = vunpack.c.l.b16 %v279
    %v351 = vunpack.c.l.b16 %v280
    %v352 = vunpack.c.l.b16 %v281
    %v353 = vunpack.c.l.b16 %v282
    %v354 = vunpack.c.l.b16 %v283
    %v355 = vunpack.c.l.b16 %v284
    %v356 = vunpack.c.l.b16 %v285
    %v357 = vunpack.c.l.b16 %v286
    %v358 = vunpack.c.l.b16 %v287
    %v359 = vunpack.c.l.b16 %v288
    %v360 = vunpack.c.l.b16 %v289
    %v361 = vunpack.c.l.b16 %v290
    %v362 = vunpack.c.l.b16 %v291
    %v363 = vunpack.c.l.b16 %v292
    %v364 = vunpack.c.l.b16 %v293
    %v365 = vunpack.c.l.b16 %v294
    %v366 = vunpack.c.l.b16 %v295
    %v367 = vunpack.c.l.b16 %v296
    %v368 = vunpack.c.l.b16 %v297
    %v369 = vunpack.c.l.b16 %v298
    %v370 = vunpack.c.l.b16 %v299
    %v371 = vunpack.c.l.b16 %v300
    %v372 = vunpack.c.l.b16 %v301
    %v373 = vpack.c.b16 %v342, %v341
    %v374 = vpack.c.b16 %v344, %v343
    %v375 = vpack.c.b16 %v346, %v345
    %v376 = vpack.c.b16 %v348, %v347
    %v377 = vpack.c.b16 %v350, %v349
    %v378 = vpack.c.b16 %v352, %v351
    %v379 = vpack.c.b16 %v354, %v353
    %v380 = vpack.c.b16 %v356, %v355
    %v381 = vpack.c.b16 %v358, %v357
    %v382 = vpack.c.b16 %v360, %v359
    %v383 = vpack.c.b16 %v362, %v361
    %v384 = vpack.c.b16 %v364, %v363
    %v385 = vpack.c.b16 %v366, %v365
    %v386 = vpack.c.b16 %v368, %v367
    %v387 = vpack.c.b16 %v370, %v369
    %v388 = vpack.c.b16 %v372, %v371
    %405 = vmatprep.subr.bf16.mxu0 0
    %406 = vmatpush1.bf16.msra.mxu0 %v373
    %407 = vmatprep.subr.bf16.mxu0 0
    %408 = vmatpush1.bf16.msra.mxu0 %v374
    %409 = vmatprep.subr.bf16.mxu0 0
    %410 = vmatpush1.bf16.msra.mxu0 %v375
    %411 = vmatprep.subr.bf16.mxu0 0
    %412 = vmatpush1.bf16.msra.mxu0 %v376
    %413 = vmatprep.subr.bf16.mxu0 0
    %414 = vmatpush1.bf16.msra.mxu0 %v377
    %415 = vmatprep.subr.bf16.mxu0 0
    %416 = vmatpush1.bf16.msra.mxu0 %v378
    %417 = vmatprep.subr.bf16.mxu0 0
    %418 = vmatpush1.bf16.msra.mxu0 %v379
    %419 = vmatprep.subr.bf16.mxu0 0
    %420 = vmatpush1.bf16.msra.mxu0 %v380
    %421 = vmatprep.subr.bf16.mxu0 0
    %422 = vmatpush1.bf16.msra.mxu0 %v381
    %423 = vmatprep.subr.bf16.mxu0 0
    %424 = vmatpush1.bf16.msra.mxu0 %v382
    %425 = vmatprep.subr.bf16.mxu0 0
    %426 = vmatpush1.bf16.msra.mxu0 %v383
    %427 = vmatprep.subr.bf16.mxu0 0
    %428 = vmatpush1.bf16.msra.mxu0 %v384
    %429 = vmatprep.subr.bf16.mxu0 0
    %430 = vmatpush1.bf16.msra.mxu0 %v385
    %431 = vmatprep.subr.bf16.mxu0 0
    %432 = vmatpush1.bf16.msra.mxu0 %v386
    %433 = vmatprep.subr.bf16.mxu0 0
    %434 = vmatpush1.bf16.msra.mxu0 %v387
    %435 = vmatprep.subr.bf16.mxu0 0
    %436 = vmatpush1.bf16.msra.mxu0 %v388
    %437 = vmatprep.mubr.bf16.mxu0 %v269
    %438 = vmatmul.mubr.bf16.gmra.mrb[0].mxu0 %v268
    %v439 = vpop.f32.mrb[0].mxu0
    %v440 = vadd.f32 %v307, %v439
    %v441 = vpop.f32.mrb[0].mxu0
    %v442 = vpop.f32.mrb[0].mxu0
    %v443 = vpop.f32.mrb[0].mxu0
    %444 = vdwg.mxu0
    %v445 = vlaneseq
    %v446 = vand.u32 %v445, 127
    %vm447 = vcmp.ge.s32.totalorder %v446, 64
    %v448 = vmul.f32 %v440, 1.442695
    %v449 = vpow.pop %v448
    %v450 = vsel %vm447, %v449, %v440
    %451 = vst [vmem:[%s7] sm:$0xff] %v450
    // Predicated region
    $region38: #{forward_decoder_packed.1} parent=1 // pred_check
      _
    $region39: #{forward_decoder_packed.1} parent=1 // pred_check_branch
      %453 = sbr.rel (0) target = $region41
    $region40: #{forward_decoder_packed.1} parent=1 // pred_region
      _
    $region41: #{forward_decoder_packed.1} parent=1 // pred_fallthru
      _
    // Predicated region
    $region42: #{forward_decoder_packed.1} parent=1 // pred_check
      _
    $region43: #{forward_decoder_packed.1} parent=1 // pred_check_branch
      %455 = sbr.rel (0) target = $region45
    $region44: #{forward_decoder_packed.1} parent=1 // pred_region
      _
    $region45: #{forward_decoder_packed.1} parent=1 // pred_fallthru
      _
    %456 = vsyncpa [#allocation3], 1
    %457 = vsyncpa [#allocation5], 1

</llo_original>
